<compile_context>
chip_gen: v7x
topology: tpu7x:2x2x1
jax: 0.10.0
libtpu: 0.0.40
codegen_flags: <defaults>
</compile_context>

<pallas_src>
import functools
import math

import jax
import jax.numpy as jnp
from jax import lax
from jax.experimental import pallas as pl
from jax.experimental.pallas import tpu as pltpu


def _round_up(v, m):
    return (v + m - 1) // m * m


def _lora_linear_kernel(x_ref, w_ref, a_ref, b_ref, bias_ref, o_ref, *, scale):
    """Computes one (TM, TN) output tile: x @ W.T + scale*(x @ B.T) @ A.T + bias."""
    x = x_ref[...]                         # (TM, K), native dtype
    dn = (((1,), (1,)), ((), ()))          # contract last dim with last dim ("@ .T")

    # Base matmul on the MXU, f32 accumulator, no operand upcast / no transpose.
    y = lax.dot_general(x, w_ref[...], dimension_numbers=dn,
                        preferred_element_type=jnp.float32)          # (TM, TN)

    # Low-rank correction: tiny (TM, rank) intermediate; scale folded in there.
    xb = lax.dot_general(x, b_ref[...], dimension_numbers=dn,
                         preferred_element_type=jnp.float32)         # (TM, r)
    xb = (xb * scale).astype(a_ref.dtype)
    y += lax.dot_general(xb, a_ref[...], dimension_numbers=dn,
                         preferred_element_type=jnp.float32)         # (TM, TN)

    y += bias_ref[...].astype(jnp.float32)                           # (1, TN) broadcast
    o_ref[...] = y.astype(o_ref.dtype)
    # TODO(synk): dropout > 0 (training-mode nn.Dropout) not implemented; module
    # default dropout=0 -> Identity, which is what this kernel reproduces.


def lora_linear(x, weight, lora_a, lora_b, bias, *, scale=3.0, tm=None, tn=None):
    """Pallas implementation of LoRALinear.forward (rank > 0, dropout = 0)."""
    orig_shape = x.shape
    out_features, in_features = weight.shape
    rank = lora_a.shape[1]                          # derived from the array, not trusted kwarg
    assert lora_b.shape == (rank, in_features)

    x2d = x.reshape(-1, in_features)
    m = x2d.shape[0]
    bias2d = bias.reshape(1, out_features)

    # Tile sizes: lane-dense N tiles (multiple of 128; 256 cap keeps tiles well
    # inside v7x's 32 MiB scoped VMEM with full-K blocks), sublane-aligned M tiles.
    if tn is None:
        tn = min(256, _round_up(out_features, 128))
    if tm is None:
        tm = min(256, _round_up(m, 8))

    m_pad = _round_up(m, tm)
    n_pad = _round_up(out_features, tn)

    # Pad M and N so every block is full and the output is lane-dense
    # (padded rows/cols are zero and sliced off afterwards).
    if m_pad != m:
        x2d = jnp.pad(x2d, ((0, m_pad - m), (0, 0)))
    w_p, a_p, bias_p = weight, lora_a, bias2d
    if n_pad != out_features:
        dp = n_pad - out_features
        w_p = jnp.pad(weight, ((0, dp), (0, 0)))
        a_p = jnp.pad(lora_a, ((0, dp), (0, 0)))
        bias_p = jnp.pad(bias2d, ((0, 0), (0, dp)))

    kernel = functools.partial(_lora_linear_kernel, scale=float(scale))

    # Grid: N slow, M fast -> the weight tile (depends only on N) is not
    # re-DMA'd between consecutive M steps.
    grid = (n_pad // tn, m_pad // tm)

    # TODO(synk): for very large in_features (> ~8K at these tile sizes) add a K
    # grid axis with an f32 VMEM accumulator + pl.when init/finalize.
    out = pl.pallas_call(
        kernel,
        out_shape=jax.ShapeDtypeStruct((m_pad, n_pad), x.dtype),
        grid_spec=pltpu.PrefetchScalarGridSpec(
            num_scalar_prefetch=0,
            grid=grid,
            in_specs=[
                pl.BlockSpec((tm, in_features), lambda n, mi: (mi, 0)),   # x
                pl.BlockSpec((tn, in_features), lambda n, mi: (n, 0)),    # weight (resident over M)
                pl.BlockSpec((tn, rank), lambda n, mi: (n, 0)),           # lora_a
                pl.BlockSpec((rank, in_features), lambda n, mi: (0, 0)),  # lora_b (resident)
                pl.BlockSpec((1, tn), lambda n, mi: (0, n)),              # bias
            ],
            out_specs=pl.BlockSpec((tm, tn), lambda n, mi: (mi, n)),
        ),
        compiler_params=pltpu.CompilerParams(
            # No reduction axis (full-K blocks); both axes independent -> both
            # parallel, so v7x's 2 TensorCores can shard the grid.
            dimension_semantics=("parallel", "parallel"),
        ),
    )(x2d, w_p, a_p, lora_b, bias_p)

    out = out[:m, :out_features]
    return out.reshape(*orig_shape[:-1], out_features)


def lora_linear_ref(x, weight, lora_a, lora_b, bias, *, scale=3.0):
    w_eff = weight + (lora_a @ lora_b) * scale
    return x @ w_eff.T + bias


if __name__ == "__main__":
    # Small shapes consistent with the module: batch=2, seq=8, hidden=32.
    batch, seq = 2, 8
    in_features, out_features, rank = 32, 32, 4
    scale = 3.0

    key = jax.random.PRNGKey(0)
    k_x, k_w, k_b, k_a, k_lb = jax.random.split(key, 5)

    x = jax.random.normal(k_x, (batch, seq, in_features), dtype=jnp.float32)
    # Base Linear params (stand-ins for the wrapped nn.Linear's weight/bias).
    weight = jax.random.normal(k_w, (out_features, in_features), jnp.float32) * 0.1
    bias = jax.random.normal(k_b, (out_features,), jnp.float32) * 0.1
    # LoRA params: kaiming_uniform_(a=sqrt(5)) for lora_a; the module zeros
    # lora_b, but we use small random values here so the LoRA path is exercised.
    bound_a = 1.0 / math.sqrt(rank)
    lora_a = jax.random.uniform(
        k_a, (out_features, rank), jnp.float32, -bound_a, bound_a
    )
    lora_b = jax.random.normal(k_lb, (rank, in_features), jnp.float32) * 0.05

    y = lora_linear(x, weight, lora_a, lora_b, bias, scale=scale)
    y = jax.block_until_ready(y)

    y_ref = lora_linear_ref(x, weight, lora_a, lora_b, bias, scale=scale)
    assert y.shape == (batch, seq, out_features)
    assert jnp.allclose(y, y_ref, atol=1e-4, rtol=1e-4), "mismatch vs reference"

    print("KERNEL_OK")
</pallas_src>

<mosaic_0001>
module attributes {stable_mosaic.version = 11 : i64} {
  func.func @_lora_linear_kernel(%arg0: i32, %arg1: i32, %arg2: memref<16x32xf32, #tpu.memory_space<vmem>>, %arg3: memref<128x32xf32, #tpu.memory_space<vmem>>, %arg4: memref<128x4xf32, #tpu.memory_space<vmem>>, %arg5: memref<4x32xf32, #tpu.memory_space<vmem>>, %arg6: memref<1x128xf32, #tpu.memory_space<vmem>>, %arg7: memref<16x128xf32, #tpu.memory_space<vmem>>) attributes {dimension_semantics = [#tpu.dimension_semantics<parallel>, #tpu.dimension_semantics<parallel>], iteration_bounds = array<i64: 1, 1>, scalar_prefetch = 0 : i64, scratch_operands = 0 : i64, tpu.core_type = #tpu.core_type<tc>, window_params = [{transform_indices = @transform_0, window_bounds = array<i64: 16, 32>}, {transform_indices = @transform_1, window_bounds = array<i64: 128, 32>}, {transform_indices = @transform_2, window_bounds = array<i64: 128, 4>}, {pipeline_mode = #tpu.pipeline_mode<synchronous>, transform_indices = @transform_3, window_bounds = array<i64: 4, 32>}, {transform_indices = @transform_4, window_bounds = array<i64: 1, 128>}, {transform_indices = @transform_5, window_bounds = array<i64: 16, 128>}]} {
    %c0 = arith.constant 0 : index
    %c0_0 = arith.constant 0 : index
    %0 = vector.load %arg2[%c0, %c0_0] : memref<16x32xf32, #tpu.memory_space<vmem>>, vector<16x32xf32>
    %c0_1 = arith.constant 0 : index
    %c0_2 = arith.constant 0 : index
    %1 = vector.load %arg3[%c0_1, %c0_2] : memref<128x32xf32, #tpu.memory_space<vmem>>, vector<128x32xf32>
    %cst = arith.constant dense<0.000000e+00> : vector<16x128xf32>
    %2 = tpu.matmul %0, %1, %cst {dimension_numbers = #tpu.dot_dimension_numbers<[1], [1], [0], [0], [0, 0, 1, 0], [], []>} : vector<16x32xf32>, vector<128x32xf32>, vector<16x128xf32> -> vector<16x128xf32>
    %c0_3 = arith.constant 0 : index
    %c0_4 = arith.constant 0 : index
    %3 = vector.load %arg5[%c0_3, %c0_4] : memref<4x32xf32, #tpu.memory_space<vmem>>, vector<4x32xf32>
    %cst_5 = arith.constant dense<0.000000e+00> : vector<16x4xf32>
    %4 = tpu.matmul %0, %3, %cst_5 {dimension_numbers = #tpu.dot_dimension_numbers<[1], [1], [0], [0], [0, 0, 1, 0], [], []>} : vector<16x32xf32>, vector<4x32xf32>, vector<16x4xf32> -> vector<16x4xf32>
    %cst_6 = arith.constant 3.000000e+00 : f32
    %5 = vector.broadcast %cst_6 : f32 to vector<16x4xf32>
    %6 = arith.mulf %4, %5 : vector<16x4xf32>
    %c0_7 = arith.constant 0 : index
    %c0_8 = arith.constant 0 : index
    %7 = vector.load %arg4[%c0_7, %c0_8] : memref<128x4xf32, #tpu.memory_space<vmem>>, vector<128x4xf32>
    %cst_9 = arith.constant dense<0.000000e+00> : vector<16x128xf32>
    %8 = tpu.matmul %6, %7, %cst_9 {dimension_numbers = #tpu.dot_dimension_numbers<[1], [1], [0], [0], [0, 0, 1, 0], [], []>} : vector<16x4xf32>, vector<128x4xf32>, vector<16x128xf32> -> vector<16x128xf32>
    %9 = arith.addf %2, %8 : vector<16x128xf32>
    %c0_10 = arith.constant 0 : index
    %c0_11 = arith.constant 0 : index
    %10 = vector.load %arg6[%c0_10, %c0_11] : memref<1x128xf32, #tpu.memory_space<vmem>>, vector<1x128xf32>
    %11 = vector.broadcast %10 : vector<1x128xf32> to vector<16x128xf32>
    %12 = arith.addf %9, %11 : vector<16x128xf32>
    %c0_12 = arith.constant 0 : index
    %c0_13 = arith.constant 0 : index
    %13 = vector.load %arg7[%c0_12, %c0_13] : memref<16x128xf32, #tpu.memory_space<vmem>>, vector<16x128xf32>
    tpu.vector_store %arg7[%c0_12, %c0_13], %12 {strides = array<i32>} : memref<16x128xf32, #tpu.memory_space<vmem>>, vector<16x128xf32>,
    return
  }
  func.func @transform_0(%arg0: i32, %arg1: i32) -> (i32, i32) {
    %c0_i32 = arith.constant 0 : i32
    %c0_i32_0 = arith.constant 0 : i32
    return %arg1, %c0_i32 : i32, i32
  }
  func.func @transform_1(%arg0: i32, %arg1: i32) -> (i32, i32) {
    %c0_i32 = arith.constant 0 : i32
    %c0_i32_0 = arith.constant 0 : i32
    return %arg0, %c0_i32 : i32, i32
  }
  func.func @transform_2(%arg0: i32, %arg1: i32) -> (i32, i32) {
    %c0_i32 = arith.constant 0 : i32
    %c0_i32_0 = arith.constant 0 : i32
    return %arg0, %c0_i32 : i32, i32
  }
  func.func @transform_3(%arg0: i32, %arg1: i32) -> (i32, i32) {
    %c0_i32 = arith.constant 0 : i32
    %c0_i32_0 = arith.constant 0 : i32
    %c0_i32_1 = arith.constant 0 : i32
    return %c0_i32, %c0_i32_0 : i32, i32
  }
  func.func @transform_4(%arg0: i32, %arg1: i32) -> (i32, i32) {
    %c0_i32 = arith.constant 0 : i32
    %c0_i32_0 = arith.constant 0 : i32
    return %c0_i32, %arg0 : i32, i32
  }
  func.func @transform_5(%arg0: i32, %arg1: i32) -> (i32, i32) {
    %c0_i32 = arith.constant 0 : i32
    return %arg1, %arg0 : i32, i32
  }
}

</mosaic_0001>

<llo_original>
// kernel: tpu_custom_call.1
$region0: #{tpu_custom_call.1}
  #allocation0 [shape = 'u32[]', space=smem, size = 0x4, offset = 0x4, fixed_abs, tag = 'smem constant byte address 0x4 - core index']
  #allocation1 [shape = 'u32[144,128]{1,0:T(1,128)}', space=vmem, size = 0x12000, scoped, tag = 'internal scratch']
  %s0 = inlined_call_operand.vmem [shape: f32[16,32], index: 0, kind: input, shape index: {}]
  %s1 = inlined_call_operand.vmem [shape: f32[128,32], index: 1, kind: input, shape index: {}]
  %s2 = inlined_call_operand.vmem [shape: f32[128,4], index: 2, kind: input, shape index: {}]
  %s3 = inlined_call_operand.vmem [shape: f32[4,32], index: 3, kind: input, shape index: {}]
  %s4 = inlined_call_operand.vmem [shape: f32[1,128], index: 4, kind: input, shape index: {}]
  %s5 = inlined_call_operand.hbm [shape: f32[16,128], index: 5, kind: output, shape index: {}]
  %s6 = sld [smem:[#allocation0]]
  $region30: #{tpu_custom_call.1} parent=0
    _
  %s8 = ssub.s32 1, %s6
  %s9 = scalar_select 0, %s8, %s6
  $region1: #{tpu_custom_call.1} parent=0
    #allocation2 [shape = 'u8[8192]{0}', space=vmem, size = 0x2000, scoped, tag = 'output window, operand 0, single buffered']
    #allocation3 [shape = 's32[1]{0}', space=sflag, size = 0x4, scoped, tag = 'scoped memory for tpu_custom_call.1']
    %10 = vsyncpa [#allocation3], 0
    // Predicated region
    $region2: #{tpu_custom_call.1} parent=1 // pred_check
      _
    $region3: #{tpu_custom_call.1} parent=1 // pred_check_branch
      %12 = sbr.rel (0) target = $region5
    $region4: #{tpu_custom_call.1} parent=1 // pred_region
      _
    $region5: #{tpu_custom_call.1} parent=1 // pred_fallthru
      _
    // Predicated region
    $region6: #{tpu_custom_call.1} parent=1 // pred_check
      _
    $region7: #{tpu_custom_call.1} parent=1 // pred_check_branch
      %14 = sbr.rel (0) target = $region9
    $region8: #{tpu_custom_call.1} parent=1 // pred_region
      _
    $region9: #{tpu_custom_call.1} parent=1 // pred_fallthru
      _
    // Predicated region
    $region10: #{tpu_custom_call.1} parent=1 // pred_check
      _
    $region11: #{tpu_custom_call.1} parent=1 // pred_check_branch
      %16 = sbr.rel (0) target = $region13
    $region12: #{tpu_custom_call.1} parent=1 // pred_region
      _
    $region13: #{tpu_custom_call.1} parent=1 // pred_fallthru
      _
    // Predicated region
    $region14: #{tpu_custom_call.1} parent=1 // pred_check
      _
    $region15: #{tpu_custom_call.1} parent=1 // pred_check_branch
      %18 = sbr.rel (0) target = $region17
    $region16: #{tpu_custom_call.1} parent=1 // pred_region
      _
    $region17: #{tpu_custom_call.1} parent=1 // pred_fallthru
      _
    // Predicated region
    $region18: #{tpu_custom_call.1} parent=1 // pred_check
      _
    $region19: #{tpu_custom_call.1} parent=1 // pred_check_branch
      %20 = sbr.rel (0) target = $region21
    $region20: #{tpu_custom_call.1} parent=1 // pred_region
      _
    $region21: #{tpu_custom_call.1} parent=1 // pred_fallthru
      _
    %v21 = vld [vmem:[%s0] sm:$0xff]
    %v22 = vld [vmem:[%s0 + $0x8] sm:$0xff]
    %v23 = vld [vmem:[%s1] sm:$0xff]
    %v24 = vld [vmem:[%s1 + $0x8] sm:$0xff]
    %v25 = vld [vmem:[%s1 + $0x10] sm:$0xff]
    %v26 = vld [vmem:[%s1 + $0x18] sm:$0xff]
    %v27 = vld [vmem:[%s1 + $0x20] sm:$0xff]
    %v28 = vld [vmem:[%s1 + $0x28] sm:$0xff]
    %v29 = vld [vmem:[%s1 + $0x30] sm:$0xff]
    %v30 = vld [vmem:[%s1 + $0x38] sm:$0xff]
    %v31 = vld [vmem:[%s1 + $0x40] sm:$0xff]
    %v32 = vld [vmem:[%s1 + $0x48] sm:$0xff]
    %v33 = vld [vmem:[%s1 + $0x50] sm:$0xff]
    %v34 = vld [vmem:[%s1 + $0x58] sm:$0xff]
    %v35 = vld [vmem:[%s1 + $0x60] sm:$0xff]
    %v36 = vld [vmem:[%s1 + $0x68] sm:$0xff]
    %v37 = vld [vmem:[%s1 + $0x70] sm:$0xff]
    %v38 = vld [vmem:[%s1 + $0x78] sm:$0xff]
    %v39 = vld [vmem:[%s3] sm:$0xf]
    %vm40 = vcmask 261120
    %v42 = vsel %vm40, %v21, 0
    %v45 = vsel %vm40, %v22, 0
    %v48 = vsel %vm40, %v39, 0
    %50 = vmatprep.subr.mxu0 0.0
    %51 = vmatpush1.xpose.msra.mxu0 %v48
    %52 = vmatprep.subr.mxu0 0.0
    %53 = vmatpush1.xpose.msra.mxu0 0.0
    %54 = vmatprep.subr.mxu0 0.0
    %55 = vmatpush1.xpose.msra.mxu0 0.0
    %56 = vmatprep.subr.mxu0 0.0
    %57 = vmatpush1.xpose.msra.mxu0 0.0
    %58 = vmatprep.subr.mxu0 0.0
    %59 = vmatpush1.xpose.msra.mxu0 0.0
    %60 = vmatprep.subr.mxu0 0.0
    %61 = vmatpush1.xpose.msra.mxu0 0.0
    %62 = vmatprep.subr.mxu0 0.0
    %63 = vmatpush1.xpose.msra.mxu0 0.0
    %64 = vmatprep.subr.mxu0 0.0
    %65 = vmatpush1.xpose.msra.mxu0 0.0
    %66 = vmatprep.subr.mxu0 0.0
    %67 = vmatpush1.xpose.msra.mxu0 0.0
    %68 = vmatprep.subr.mxu0 0.0
    %69 = vmatpush1.xpose.msra.mxu0 0.0
    %70 = vmatprep.subr.mxu0 0.0
    %71 = vmatpush1.xpose.msra.mxu0 0.0
    %72 = vmatprep.subr.mxu0 0.0
    %73 = vmatpush1.xpose.msra.mxu0 0.0
    %74 = vmatprep.subr.mxu0 0.0
    %75 = vmatpush1.xpose.msra.mxu0 0.0
    %76 = vmatprep.subr.mxu0 0.0
    %77 = vmatpush1.xpose.msra.mxu0 0.0
    %78 = vmatprep.subr.mxu0 0.0
    %79 = vmatpush1.xpose.msra.mxu0 0.0
    %80 = vmatprep.subr.mxu0 0.0
    %81 = vmatpush1.xpose.msra.mxu0 0.0
    %82 = vmatprep.subr.mxu0 0.0
    %83 = vmatpush1.xpose.msra.mxu0 0.0
    %84 = vmatprep.subr.mxu0 0.0
    %85 = vmatpush1.xpose.msra.mxu0 0.0
    %86 = vmatprep.subr.mxu0 0.0
    %87 = vmatpush1.xpose.msra.mxu0 0.0
    %88 = vmatprep.subr.mxu0 0.0
    %89 = vmatpush1.xpose.msra.mxu0 0.0
    %90 = vmatprep.subr.mxu0 0.0
    %91 = vmatpush1.xpose.msra.mxu0 0.0
    %92 = vmatprep.subr.mxu0 0.0
    %93 = vmatpush1.xpose.msra.mxu0 0.0
    %94 = vmatprep.subr.mxu0 0.0
    %95 = vmatpush1.xpose.msra.mxu0 0.0
    %96 = vmatprep.subr.mxu0 0.0
    %97 = vmatpush1.xpose.msra.mxu0 0.0
    %98 = vmatprep.subr.mxu0 0.0
    %99 = vmatpush1.xpose.msra.mxu0 0.0
    %100 = vmatprep.subr.mxu0 0.0
    %101 = vmatpush1.xpose.msra.mxu0 0.0
    %102 = vmatprep.subr.mxu0 0.0
    %103 = vmatpush1.xpose.msra.mxu0 0.0
    %104 = vmatprep.subr.mxu0 0.0
    %105 = vmatpush1.xpose.msra.mxu0 0.0
    %106 = vmatprep.subr.mxu0 0.0
    %107 = vmatpush1.xpose.msra.mxu0 0.0
    %108 = vmatprep.subr.mxu0 0.0
    %109 = vmatpush1.xpose.msra.mxu0 0.0
    %110 = vmatprep.subr.mxu0 0.0
    %111 = vmatpush1.xpose.msra.mxu0 0.0
    %112 = vmatprep.subr.mxu0 0.0
    %113 = vmatpush1.xpose.msra.mxu0 0.0
    %114 = vmatprep.mubr.f32.mxu0 0.0
    %115 = vmatmul.mubr.f32.gmra.mrb[0].mxu0 %v42
    %v116 = vpop.f32.mrb[0].mxu0
    %v117 = vadd.f32 0.0, %v116
    %v118 = vpop.f32.mrb[0].mxu0
    %119 = vmatprep.mubr.f32.mxu0 0.0
    %120 = vmatmul.mubr.f32.gmra.mrb[0].mxu0 %v45
    %v121 = vpop.f32.mrb[0].mxu0
    %v122 = vadd.f32 0.0, %v121
    %v123 = vpop.f32.mrb[0].mxu0
    %124 = vdwg.mxu0
    %v125 = vmul.f32 %v117, 3.0
    %v126 = vmul.f32 %v122, 3.0
    %v127 = vld [vmem:[%s2] sm:$0xff]
    %v128 = vld [vmem:[%s2 + $0x8] sm:$0xff]
    %v129 = vld [vmem:[%s2 + $0x10] sm:$0xff]
    %v130 = vld [vmem:[%s2 + $0x18] sm:$0xff]
    %v131 = vld [vmem:[%s2 + $0x20] sm:$0xff]
    %v132 = vld [vmem:[%s2 + $0x28] sm:$0xff]
    %v133 = vld [vmem:[%s2 + $0x30] sm:$0xff]
    %v134 = vld [vmem:[%s2 + $0x38] sm:$0xff]
    %v135 = vld [vmem:[%s2 + $0x40] sm:$0xff]
    %v136 = vld [vmem:[%s2 + $0x48] sm:$0xff]
    %v137 = vld [vmem:[%s2 + $0x50] sm:$0xff]
    %v138 = vld [vmem:[%s2 + $0x58] sm:$0xff]
    %v139 = vld [vmem:[%s2 + $0x60] sm:$0xff]
    %v140 = vld [vmem:[%s2 + $0x68] sm:$0xff]
    %v141 = vld [vmem:[%s2 + $0x70] sm:$0xff]
    %v142 = vld [vmem:[%s2 + $0x78] sm:$0xff]
    %vm143 = vcmask 31744
    %v145 = vsel %vm143, %v125, 0
    %v148 = vsel %vm143, %v126, 0
    %v151 = vsel %vm143, %v127, 0
    %v154 = vsel %vm143, %v128, 0
    %v157 = vsel %vm143, %v129, 0
    %v160 = vsel %vm143, %v130, 0
    %v163 = vsel %vm143, %v131, 0
    %v166 = vsel %vm143, %v132, 0
    %v169 = vsel %vm143, %v133, 0
    %v172 = vsel %vm143, %v134, 0
    %v175 = vsel %vm143, %v135, 0
    %v178 = vsel %vm143, %v136, 0
    %v181 = vsel %vm143, %v137, 0
    %v184 = vsel %vm143, %v138, 0
    %v187 = vsel %vm143, %v139, 0
    %v190 = vsel %vm143, %v140, 0
    %v193 = vsel %vm143, %v141, 0
    %v196 = vsel %vm143, %v142, 0
    %198 = vmatprep.subr.mxu0 0.0
    %199 = vmatpush1.xpose.msra.mxu0 %v151
    %200 = vmatprep.subr.mxu0 0.0
    %201 = vmatpush1.xpose.msra.mxu0 %v154
    %202 = vmatprep.subr.mxu0 0.0
    %203 = vmatpush1.xpose.msra.mxu0 %v157
    %204 = vmatprep.subr.mxu0 0.0
    %205 = vmatpush1.xpose.msra.mxu0 %v160
    %206 = vmatprep.subr.mxu0 0.0
    %207 = vmatpush1.xpose.msra.mxu0 %v163
    %208 = vmatprep.subr.mxu0 0.0
    %209 = vmatpush1.xpose.msra.mxu0 %v166
    %210 = vmatprep.subr.mxu0 0.0
    %211 = vmatpush1.xpose.msra.mxu0 %v169
    %212 = vmatprep.subr.mxu0 0.0
    %213 = vmatpush1.xpose.msra.mxu0 %v172
    %214 = vmatprep.subr.mxu0 0.0
    %215 = vmatpush1.xpose.msra.mxu0 %v175
    %216 = vmatprep.subr.mxu0 0.0
    %217 = vmatpush1.xpose.msra.mxu0 %v178
    %218 = vmatprep.subr.mxu0 0.0
    %219 = vmatpush1.xpose.msra.mxu0 %v181
    %220 = vmatprep.subr.mxu0 0.0
    %221 = vmatpush1.xpose.msra.mxu0 %v184
    %222 = vmatprep.subr.mxu0 0.0
    %223 = vmatpush1.xpose.msra.mxu0 %v187
    %224 = vmatprep.subr.mxu0 0.0
    %225 = vmatpush1.xpose.msra.mxu0 %v190
    %226 = vmatprep.subr.mxu0 0.0
    %227 = vmatpush1.xpose.msra.mxu0 %v193
    %228 = vmatprep.subr.mxu0 0.0
    %229 = vmatpush1.xpose.msra.mxu0 %v196
    %230 = vmatprep.subr.mxu0 0.0
    %231 = vmatpush1.xpose.msra.mxu0 0.0
    %232 = vmatprep.subr.mxu0 0.0
    %233 = vmatpush1.xpose.msra.mxu0 0.0
    %234 = vmatprep.subr.mxu0 0.0
    %235 = vmatpush1.xpose.msra.mxu0 0.0
    %236 = vmatprep.subr.mxu0 0.0
    %237 = vmatpush1.xpose.msra.mxu0 0.0
    %238 = vmatprep.subr.mxu0 0.0
    %239 = vmatpush1.xpose.msra.mxu0 0.0
    %240 = vmatprep.subr.mxu0 0.0
    %241 = vmatpush1.xpose.msra.mxu0 0.0
    %242 = vmatprep.subr.mxu0 0.0
    %243 = vmatpush1.xpose.msra.mxu0 0.0
    %244 = vmatprep.subr.mxu0 0.0
    %245 = vmatpush1.xpose.msra.mxu0 0.0
    %246 = vmatprep.subr.mxu0 0.0
    %247 = vmatpush1.xpose.msra.mxu0 0.0
    %248 = vmatprep.subr.mxu0 0.0
    %249 = vmatpush1.xpose.msra.mxu0 0.0
    %250 = vmatprep.subr.mxu0 0.0
    %251 = vmatpush1.xpose.msra.mxu0 0.0
    %252 = vmatprep.subr.mxu0 0.0
    %253 = vmatpush1.xpose.msra.mxu0 0.0
    %254 = vmatprep.subr.mxu0 0.0
    %255 = vmatpush1.xpose.msra.mxu0 0.0
    %256 = vmatprep.subr.mxu0 0.0
    %257 = vmatpush1.xpose.msra.mxu0 0.0
    %258 = vmatprep.subr.mxu0 0.0
    %259 = vmatpush1.xpose.msra.mxu0 0.0
    %260 = vmatprep.subr.mxu0 0.0
    %261 = vmatpush1.xpose.msra.mxu0 0.0
    %262 = vmatprep.mubr.f32.mxu0 0.0
    %263 = vmatmul.mubr.f32.gmra.mrb[0].mxu0 %v145
    %v264 = vpop.f32.mrb[0].mxu0
    %v265 = vadd.f32 0.0, %v264
    %v266 = vpop.f32.mrb[0].mxu0
    %267 = vmatprep.mubr.f32.mxu0 0.0
    %268 = vmatmul.mubr.f32.gmra.mrb[0].mxu0 %v148
    %v269 = vpop.f32.mrb[0].mxu0
    %v270 = vadd.f32 0.0, %v269
    %v271 = vpop.f32.mrb[0].mxu0
    %272 = vdwg.mxu0
    %v274 = vsel %vm40, %v23, 0
    %v277 = vsel %vm40, %v24, 0
    %v280 = vsel %vm40, %v25, 0
    %v283 = vsel %vm40, %v26, 0
    %v286 = vsel %vm40, %v27, 0
    %v289 = vsel %vm40, %v28, 0
    %v292 = vsel %vm40, %v29, 0
    %v295 = vsel %vm40, %v30, 0
    %v298 = vsel %vm40, %v31, 0
    %v301 = vsel %vm40, %v32, 0
    %v304 = vsel %vm40, %v33, 0
    %v307 = vsel %vm40, %v34, 0
    %v310 = vsel %vm40, %v35, 0
    %v313 = vsel %vm40, %v36, 0
    %v316 = vsel %vm40, %v37, 0
    %v319 = vsel %vm40, %v38, 0
    %321 = vmatprep.subr.mxu0 0.0
    %322 = vmatpush1.xpose.msra.mxu0 %v274
    %323 = vmatprep.subr.mxu0 0.0
    %324 = vmatpush1.xpose.msra.mxu0 %v277
    %325 = vmatprep.subr.mxu0 0.0
    %326 = vmatpush1.xpose.msra.mxu0 %v280
    %327 = vmatprep.subr.mxu0 0.0
    %328 = vmatpush1.xpose.msra.mxu0 %v283
    %329 = vmatprep.subr.mxu0 0.0
    %330 = vmatpush1.xpose.msra.mxu0 %v286
    %331 = vmatprep.subr.mxu0 0.0
    %332 = vmatpush1.xpose.msra.mxu0 %v289
    %333 = vmatprep.subr.mxu0 0.0
    %334 = vmatpush1.xpose.msra.mxu0 %v292
    %335 = vmatprep.subr.mxu0 0.0
    %336 = vmatpush1.xpose.msra.mxu0 %v295
    %337 = vmatprep.subr.mxu0 0.0
    %338 = vmatpush1.xpose.msra.mxu0 %v298
    %339 = vmatprep.subr.mxu0 0.0
    %340 = vmatpush1.xpose.msra.mxu0 %v301
    %341 = vmatprep.subr.mxu0 0.0
    %342 = vmatpush1.xpose.msra.mxu0 %v304
    %343 = vmatprep.subr.mxu0 0.0
    %344 = vmatpush1.xpose.msra.mxu0 %v307
    %345 = vmatprep.subr.mxu0 0.0
    %346 = vmatpush1.xpose.msra.mxu0 %v310
    %347 = vmatprep.subr.mxu0 0.0
    %348 = vmatpush1.xpose.msra.mxu0 %v313
    %349 = vmatprep.subr.mxu0 0.0
    %350 = vmatpush1.xpose.msra.mxu0 %v316
    %351 = vmatprep.subr.mxu0 0.0
    %352 = vmatpush1.xpose.msra.mxu0 %v319
    %353 = vmatprep.subr.mxu0 0.0
    %354 = vmatpush1.xpose.msra.mxu0 0.0
    %355 = vmatprep.subr.mxu0 0.0
    %356 = vmatpush1.xpose.msra.mxu0 0.0
    %357 = vmatprep.subr.mxu0 0.0
    %358 = vmatpush1.xpose.msra.mxu0 0.0
    %359 = vmatprep.subr.mxu0 0.0
    %360 = vmatpush1.xpose.msra.mxu0 0.0
    %361 = vmatprep.subr.mxu0 0.0
    %362 = vmatpush1.xpose.msra.mxu0 0.0
    %363 = vmatprep.subr.mxu0 0.0
    %364 = vmatpush1.xpose.msra.mxu0 0.0
    %365 = vmatprep.subr.mxu0 0.0
    %366 = vmatpush1.xpose.msra.mxu0 0.0
    %367 = vmatprep.subr.mxu0 0.0
    %368 = vmatpush1.xpose.msra.mxu0 0.0
    %369 = vmatprep.subr.mxu0 0.0
    %370 = vmatpush1.xpose.msra.mxu0 0.0
    %371 = vmatprep.subr.mxu0 0.0
    %372 = vmatpush1.xpose.msra.mxu0 0.0
    %373 = vmatprep.subr.mxu0 0.0
    %374 = vmatpush1.xpose.msra.mxu0 0.0
    %375 = vmatprep.subr.mxu0 0.0
    %376 = vmatpush1.xpose.msra.mxu0 0.0
    %377 = vmatprep.subr.mxu0 0.0
    %378 = vmatpush1.xpose.msra.mxu0 0.0
    %379 = vmatprep.subr.mxu0 0.0
    %380 = vmatpush1.xpose.msra.mxu0 0.0
    %381 = vmatprep.subr.mxu0 0.0
    %382 = vmatpush1.xpose.msra.mxu0 0.0
    %383 = vmatprep.subr.mxu0 0.0
    %384 = vmatpush1.xpose.msra.mxu0 0.0
    %385 = vmatprep.mubr.f32.mxu0 0.0
    %386 = vmatmul.mubr.f32.gmra.mrb[0].mxu0 %v42
    %v387 = vpop.f32.mrb[0].mxu0
    %v388 = vadd.f32 %v265, %v387
    %v389 = vpop.f32.mrb[0].mxu0
    %390 = vmatprep.mubr.f32.mxu0 0.0
    %391 = vmatmul.mubr.f32.gmra.mrb[0].mxu0 %v45
    %v392 = vpop.f32.mrb[0].mxu0
    %v393 = vadd.f32 %v270, %v392
    %v394 = vpop.f32.mrb[0].mxu0
    %395 = vdwg.mxu0
    %v396 = vld [vmem:[%s4] sm:$0x1]
    %v398 = vlaneseq
    %v399 = vshrl.u32 %v398, 7
    %v400 = vsub.s32 0, %v399
    %v401 = vrot.slane %v396, %v400
    %v403 = vadd.f32 %v388, %v401
    %v404 = vadd.f32 %v393, %v401
    %405 = vst [vmem:[#allocation2] sm:$0xff] %v403
    %406 = vst [vmem:[#allocation2 + $0x8] sm:$0xff] %v404
    // Predicated region
    $region22: #{tpu_custom_call.1} parent=1 // pred_check
      _
    $region23: #{tpu_custom_call.1} parent=1 // pred_check_branch
      %408 = sbr.rel (0) target = $region25
    $region24: #{tpu_custom_call.1} parent=1 // pred_region
      %s410 = ssub.s32 256, 256
      %411 = vsyncadd [#allocation3], %s410
      %s412 = sshll.u32 [#allocation2], 4
      %s413 = int_to_ptr.vmem [resolvable:$true] %s412
      %418 = dma.vmem_to_hbm [thread:$0]  %s413, 256, %s5, [#allocation3], 128, 128, 8
    $region25: #{tpu_custom_call.1} parent=1 // pred_fallthru
      _
    // Predicated region
    $region26: #{tpu_custom_call.1} parent=1 // pred_check
      _
    $region27: #{tpu_custom_call.1} parent=1 // pred_check_branch
      %420 = sbr.rel (0) target = $region29
    $region28: #{tpu_custom_call.1} parent=1 // pred_region
      %421 = dma.done [#allocation3], 256
    $region29: #{tpu_custom_call.1} parent=1 // pred_fallthru
      _
    %422 = vsyncpa [#allocation3], 1

</llo_original>
